<compile_context>
chip_gen: v7x
topology: tpu7x:2x2x1
jax: 0.10.0
libtpu: 0.0.40
codegen_flags: <defaults>
</compile_context>

<pallas_src>
import functools

import jax
import jax.numpy as jnp
from jax import lax
from jax.experimental import pallas as pl
from jax.experimental.pallas import tpu as pltpu


def _policy_kernel(x_ref, w1_ref, b1_ref, w2_ref, b2_ref, wht_ref, bht_ref,
                   out_ref, *, action_bound, action_dim):
    # fc1 + relu  (bf16 operands -> MXU, f32 accumulation, f32 VPU math)
    x = x_ref[...].astype(jnp.bfloat16)
    h = jnp.dot(x, w1_ref[...], preferred_element_type=jnp.float32) + b1_ref[...]
    h = jnp.maximum(h, 0.0)

    # fc2 + relu  (dominant 128x128 matmul)
    h = jnp.dot(h.astype(jnp.bfloat16), w2_ref[...],
                preferred_element_type=jnp.float32) + b2_ref[...]
    h = jnp.maximum(h, 0.0)

    # Fused mu/std head, lane-dense: wht is (2*action_dim, hidden), h is (tb, hidden);
    # contract both on hidden -> s is (2*action_dim, tb) with batch on the lane axis.
    s = lax.dot_general(
        wht_ref[...], h.astype(jnp.bfloat16),
        dimension_numbers=(((1,), (1,)), ((), ())),
        preferred_element_type=jnp.float32) + bht_ref[...]

    # Sublanes [0, action_dim) are the mu head, [action_dim, 2*action_dim) the std head.
    mu = action_bound * jnp.tanh(s)
    sp = jnp.where(s > 20.0, s, jnp.log1p(jnp.exp(jnp.minimum(s, 20.0))))  # softplus

    row = lax.broadcasted_iota(jnp.int32, s.shape, 0)
    out_ref[...] = jnp.where(row < action_dim, mu, sp)


def _round_up(n, m):
    return ((n + m - 1) // m) * m


def _choose_tiling(batch, target=4096):
    """Returns (batch_tile, padded_batch).

    * batch <= 128: one grid step over the whole (8-rounded) batch.
    * batch  > 128: tile is a multiple of 128 (lane-dense output block needs its
      last dim divisible by 128), capped at both `target` and half the 128-rounded
      batch so the grid has >= 2 steps (v7x megacore); batch is padded to a multiple
      of the tile (wrapper slices the padding back off).
    """
    if batch <= 128:
        pb = _round_up(batch, 8)
        return pb, pb
    tb = min(target, _round_up(batch, 128) // 2)
    tb = max(128, (tb // 128) * 128)
    pb = _round_up(batch, tb)
    return tb, pb


def prepare_params(params):
    """One-time (per parameter update) kernel-ready prep:
    fuse + transpose the mu/std head, cast matmul weights to bf16, keep biases f32."""
    w_head_t = jnp.concatenate([params["w_mu"].T, params["w_std"].T], axis=0)
    b_head_t = jnp.concatenate(
        [params["b_mu"].reshape(-1, 1), params["b_std"].reshape(-1, 1)], axis=0)
    return {
        "w1": params["w1"].astype(jnp.bfloat16),
        "b1": params["b1"].astype(jnp.float32),
        "w2": params["w2"].astype(jnp.bfloat16),
        "b2": params["b2"].astype(jnp.float32),
        "w_head_t": w_head_t.astype(jnp.bfloat16),   # (2*action_dim, hidden)
        "b_head_t": b_head_t.astype(jnp.float32),    # (2*action_dim, 1)
    }


def policy_net_continuous(x, prep, action_bound):
    """x: [batch, state_dim] float32. Returns (mu, std), each [batch, action_dim]."""
    batch, state_dim = x.shape
    hidden = prep["w1"].shape[1]
    head_dim = prep["w_head_t"].shape[0]
    action_dim = head_dim // 2

    tb, pb = _choose_tiling(batch)
    if pb != batch:
        x = jnp.pad(x, ((0, pb - batch), (0, 0)))
    grid = (pb // tb,)

    # Weights/biases: constant block index -> VMEM-resident across grid steps.
    w_spec = lambda shape: pl.BlockSpec(shape, lambda i: (0, 0))

    flops = 2 * pb * (state_dim * hidden + hidden * hidden + hidden * head_dim)
    bytes_accessed = (
        4 * pb * state_dim                                             # x (f32)
        + 2 * (state_dim * hidden + hidden * hidden + hidden * head_dim)  # bf16 weights
        + 4 * (2 * hidden + head_dim)                                  # f32 biases
        + 4 * head_dim * pb)                                           # output (f32)

    out = pl.pallas_call(
        functools.partial(_policy_kernel,
                          action_bound=action_bound, action_dim=action_dim),
        out_shape=jax.ShapeDtypeStruct((head_dim, pb), jnp.float32),
        grid_spec=pltpu.PrefetchScalarGridSpec(
            num_scalar_prefetch=0,
            grid=grid,
            in_specs=[
                pl.BlockSpec((tb, state_dim), lambda i: (i, 0)),  # x (batch-tiled)
                w_spec((state_dim, hidden)),                      # W1 (bf16)
                w_spec((1, hidden)),                              # b1
                w_spec((hidden, hidden)),                         # W2 (bf16)
                w_spec((1, hidden)),                              # b2
                w_spec((head_dim, hidden)),                       # W_head^T (bf16)
                w_spec((head_dim, 1)),                            # b_head^T
            ],
            out_specs=pl.BlockSpec((head_dim, tb), lambda i: (0, i)),
        ),
        compiler_params=pltpu.CompilerParams(
            dimension_semantics=("parallel",),     # batch tiles shard across v7x TCs
            vmem_limit_bytes=32 * 1024 * 1024,
        ),
        cost_estimate=pl.CostEstimate(
            flops=flops,
            transcendentals=3 * pb * head_dim,     # tanh + exp + log1p per head element
            bytes_accessed=bytes_accessed,
        ),
    )(x, prep["w1"], prep["b1"], prep["w2"], prep["b2"],
      prep["w_head_t"], prep["b_head_t"])

    mu = out[:action_dim, :batch].T
    std = out[action_dim:, :batch].T
    return mu, std


def init_params(key, state_dim, hidden_dim, action_dim):
    """Mirrors init_net_weights: weights ~ U(-0.01, 0.01), biases = 0. (f32 master copy;
    weights are stored [in, out], i.e. transposed vs torch.nn.Linear, so x @ W == torch."""
    r = 0.01
    k1, k2, k3, k4 = jax.random.split(key, 4)
    return {
        "w1": jax.random.uniform(k1, (state_dim, hidden_dim), jnp.float32, -r, r),
        "b1": jnp.zeros((1, hidden_dim), jnp.float32),
        "w2": jax.random.uniform(k2, (hidden_dim, hidden_dim), jnp.float32, -r, r),
        "b2": jnp.zeros((1, hidden_dim), jnp.float32),
        "w_mu": jax.random.uniform(k3, (hidden_dim, action_dim), jnp.float32, -r, r),
        "b_mu": jnp.zeros((1, action_dim), jnp.float32),
        "w_std": jax.random.uniform(k4, (hidden_dim, action_dim), jnp.float32, -r, r),
        "b_std": jnp.zeros((1, action_dim), jnp.float32),
    }


def _reference(x, params, action_bound):
    h = jnp.maximum(x @ params["w1"] + params["b1"], 0.0)
    h = jnp.maximum(h @ params["w2"] + params["b2"], 0.0)
    mu = action_bound * jnp.tanh(h @ params["w_mu"] + params["b_mu"])
    std = jax.nn.softplus(h @ params["w_std"] + params["b_std"])
    return mu, std


if __name__ == "__main__":
    # Small shapes consistent with the module: hidden_dim=128 (as in the source),
    # state_dim=8, action_dim=4, action_bound=2.0, batch=2.
    state_dim, hidden_dim, action_dim = 8, 128, 4
    action_bound = 2.0
    batch = 2

    key = jax.random.PRNGKey(0)
    key_x, key_p = jax.random.split(key)
    x = jax.random.normal(key_x, (batch, state_dim), dtype=jnp.float32)
    params = init_params(key_p, state_dim, hidden_dim, action_dim)
    prep = prepare_params(params)   # once per parameter update, not per call

    mu, std = policy_net_continuous(x, prep, action_bound)
    jax.block_until_ready((mu, std))

    # bf16 matmul operands -> loosen tolerance vs. the f32 reference.
    mu_ref, std_ref = _reference(x, params, action_bound)
    assert mu.shape == (batch, action_dim) and std.shape == (batch, action_dim)
    assert jnp.allclose(mu, mu_ref, atol=1e-3, rtol=1e-2), "mu mismatch"
    assert jnp.allclose(std, std_ref, atol=1e-3, rtol=1e-2), "std mismatch"

    # Exercise the multi-step (grid > 1), padded-batch path with an awkward batch.
    big = 300   # pads to 384, tile 128, grid=(3,)
    xb = jax.random.normal(key_x, (big, state_dim), dtype=jnp.float32)
    mub, stdb = policy_net_continuous(xb, prep, action_bound)
    jax.block_until_ready((mub, stdb))
    mub_ref, stdb_ref = _reference(xb, params, action_bound)
    assert mub.shape == (big, action_dim) and stdb.shape == (big, action_dim)
    assert jnp.allclose(mub, mub_ref, atol=1e-3, rtol=1e-2), "mu mismatch (tiled)"
    assert jnp.allclose(stdb, stdb_ref, atol=1e-3, rtol=1e-2), "std mismatch (tiled)"

    print("KERNEL_OK")
</pallas_src>

<mosaic_0001>
module attributes {stable_mosaic.version = 11 : i64} {
  func.func @_policy_kernel(%arg0: i32, %arg1: memref<8x8xf32, #tpu.memory_space<vmem>>, %arg2: memref<8x128xbf16, #tpu.memory_space<vmem>>, %arg3: memref<1x128xf32, #tpu.memory_space<vmem>>, %arg4: memref<128x128xbf16, #tpu.memory_space<vmem>>, %arg5: memref<1x128xf32, #tpu.memory_space<vmem>>, %arg6: memref<8x128xbf16, #tpu.memory_space<vmem>>, %arg7: memref<8x1xf32, #tpu.memory_space<vmem>>, %arg8: memref<8x8xf32, #tpu.memory_space<vmem>>) attributes {dimension_semantics = [#tpu.dimension_semantics<parallel>], iteration_bounds = array<i64: 1>, scalar_prefetch = 0 : i64, scratch_operands = 0 : i64, tpu.core_type = #tpu.core_type<tc>, window_params = [{transform_indices = @transform_0, window_bounds = array<i64: 8, 8>}, {pipeline_mode = #tpu.pipeline_mode<synchronous>, transform_indices = @transform_1, window_bounds = array<i64: 8, 128>}, {pipeline_mode = #tpu.pipeline_mode<synchronous>, transform_indices = @transform_2, window_bounds = array<i64: 1, 128>}, {pipeline_mode = #tpu.pipeline_mode<synchronous>, transform_indices = @transform_3, window_bounds = array<i64: 128, 128>}, {pipeline_mode = #tpu.pipeline_mode<synchronous>, transform_indices = @transform_4, window_bounds = array<i64: 1, 128>}, {pipeline_mode = #tpu.pipeline_mode<synchronous>, transform_indices = @transform_5, window_bounds = array<i64: 8, 128>}, {pipeline_mode = #tpu.pipeline_mode<synchronous>, transform_indices = @transform_6, window_bounds = array<i64: 8, 1>}, {transform_indices = @transform_7, window_bounds = array<i64: 8, 8>}]} {
    %c0 = arith.constant 0 : index
    %c0_0 = arith.constant 0 : index
    %0 = vector.load %arg1[%c0, %c0_0] : memref<8x8xf32, #tpu.memory_space<vmem>>, vector<8x8xf32>
    %1 = arith.truncf %0 : vector<8x8xf32> to vector<8x8xbf16>
    %c0_1 = arith.constant 0 : index
    %c0_2 = arith.constant 0 : index
    %2 = vector.load %arg2[%c0_1, %c0_2] : memref<8x128xbf16, #tpu.memory_space<vmem>>, vector<8x128xbf16>
    %cst = arith.constant dense<0.000000e+00> : vector<8x128xf32>
    %3 = tpu.matmul %1, %2, %cst {dimension_numbers = #tpu.dot_dimension_numbers<[1], [0], [0], [1], [0, 0, 1, 1], [], []>} : vector<8x8xbf16>, vector<8x128xbf16>, vector<8x128xf32> -> vector<8x128xf32>
    %c0_3 = arith.constant 0 : index
    %c0_4 = arith.constant 0 : index
    %4 = vector.load %arg3[%c0_3, %c0_4] : memref<1x128xf32, #tpu.memory_space<vmem>>, vector<1x128xf32>
    %5 = vector.broadcast %4 : vector<1x128xf32> to vector<8x128xf32>
    %6 = arith.addf %3, %5 : vector<8x128xf32>
    %cst_5 = arith.constant 0.000000e+00 : f32
    %7 = vector.broadcast %cst_5 : f32 to vector<8x128xf32>
    %8 = arith.maximumf %6, %7 : vector<8x128xf32>
    %9 = arith.truncf %8 : vector<8x128xf32> to vector<8x128xbf16>
    %c0_6 = arith.constant 0 : index
    %c0_7 = arith.constant 0 : index
    %10 = vector.load %arg4[%c0_6, %c0_7] : memref<128x128xbf16, #tpu.memory_space<vmem>>, vector<128x128xbf16>
    %cst_8 = arith.constant dense<0.000000e+00> : vector<8x128xf32>
    %11 = tpu.matmul %9, %10, %cst_8 {dimension_numbers = #tpu.dot_dimension_numbers<[1], [0], [0], [1], [0, 0, 1, 1], [], []>} : vector<8x128xbf16>, vector<128x128xbf16>, vector<8x128xf32> -> vector<8x128xf32>
    %c0_9 = arith.constant 0 : index
    %c0_10 = arith.constant 0 : index
    %12 = vector.load %arg5[%c0_9, %c0_10] : memref<1x128xf32, #tpu.memory_space<vmem>>, vector<1x128xf32>
    %13 = vector.broadcast %12 : vector<1x128xf32> to vector<8x128xf32>
    %14 = arith.addf %11, %13 : vector<8x128xf32>
    %cst_11 = arith.constant 0.000000e+00 : f32
    %15 = vector.broadcast %cst_11 : f32 to vector<8x128xf32>
    %16 = arith.maximumf %14, %15 : vector<8x128xf32>
    %c0_12 = arith.constant 0 : index
    %c0_13 = arith.constant 0 : index
    %17 = vector.load %arg6[%c0_12, %c0_13] : memref<8x128xbf16, #tpu.memory_space<vmem>>, vector<8x128xbf16>
    %18 = arith.truncf %16 : vector<8x128xf32> to vector<8x128xbf16>
    %cst_14 = arith.constant dense<0.000000e+00> : vector<8x8xf32>
    %19 = tpu.matmul %17, %18, %cst_14 {dimension_numbers = #tpu.dot_dimension_numbers<[1], [1], [0], [0], [0, 0, 1, 0], [], []>} : vector<8x128xbf16>, vector<8x128xbf16>, vector<8x8xf32> -> vector<8x8xf32>
    %c0_15 = arith.constant 0 : index
    %c0_16 = arith.constant 0 : index
    %20 = vector.load %arg7[%c0_15, %c0_16] : memref<8x1xf32, #tpu.memory_space<vmem>>, vector<8x1xf32>
    %21 = vector.broadcast %20 : vector<8x1xf32> to vector<8x8xf32>
    %22 = arith.addf %19, %21 : vector<8x8xf32>
    %23 = math.tanh %22 : vector<8x8xf32>
    %cst_17 = arith.constant 2.000000e+00 : f32
    %24 = vector.broadcast %cst_17 : f32 to vector<8x8xf32>
    %25 = arith.mulf %24, %23 : vector<8x8xf32>
    %cst_18 = arith.constant 2.000000e+01 : f32
    %26 = vector.broadcast %cst_18 : f32 to vector<8x8xf32>
    %27 = arith.cmpf ogt, %22, %26 : vector<8x8xf32>
    %cst_19 = arith.constant 2.000000e+01 : f32
    %28 = vector.broadcast %cst_19 : f32 to vector<8x8xf32>
    %29 = arith.minimumf %22, %28 : vector<8x8xf32>
    %30 = math.exp %29 : vector<8x8xf32>
    %31 = math.log1p %30 : vector<8x8xf32>
    %32 = arith.select %27, %22, %31 : vector<8x8xi1>, vector<8x8xf32>
    %33 = tpu.iota {dimensions = array<i32: 0>} : vector<8x8xi32>
    %c4_i32 = arith.constant 4 : i32
    %34 = vector.broadcast %c4_i32 : i32 to vector<8x8xi32>
    %35 = arith.cmpi slt, %33, %34 : vector<8x8xi32>
    %36 = arith.select %35, %25, %32 : vector<8x8xi1>, vector<8x8xf32>
    %c0_20 = arith.constant 0 : index
    %c0_21 = arith.constant 0 : index
    %37 = vector.load %arg8[%c0_20, %c0_21] : memref<8x8xf32, #tpu.memory_space<vmem>>, vector<8x8xf32>
    tpu.vector_store %arg8[%c0_20, %c0_21], %36 {strides = array<i32>} : memref<8x8xf32, #tpu.memory_space<vmem>>, vector<8x8xf32>,
    return
  }
  func.func @transform_0(%arg0: i32) -> (i32, i32) {
    %c0_i32 = arith.constant 0 : i32
    %c0_i32_0 = arith.constant 0 : i32
    return %arg0, %c0_i32 : i32, i32
  }
  func.func @transform_1(%arg0: i32) -> (i32, i32) {
    %c0_i32 = arith.constant 0 : i32
    %c0_i32_0 = arith.constant 0 : i32
    %c0_i32_1 = arith.constant 0 : i32
    return %c0_i32, %c0_i32_0 : i32, i32
  }
  func.func @transform_2(%arg0: i32) -> (i32, i32) {
    %c0_i32 = arith.constant 0 : i32
    %c0_i32_0 = arith.constant 0 : i32
    %c0_i32_1 = arith.constant 0 : i32
    return %c0_i32, %c0_i32_0 : i32, i32
  }
  func.func @transform_3(%arg0: i32) -> (i32, i32) {
    %c0_i32 = arith.constant 0 : i32
    %c0_i32_0 = arith.constant 0 : i32
    %c0_i32_1 = arith.constant 0 : i32
    return %c0_i32, %c0_i32_0 : i32, i32
  }
  func.func @transform_4(%arg0: i32) -> (i32, i32) {
    %c0_i32 = arith.constant 0 : i32
    %c0_i32_0 = arith.constant 0 : i32
    %c0_i32_1 = arith.constant 0 : i32
    return %c0_i32, %c0_i32_0 : i32, i32
  }
  func.func @transform_5(%arg0: i32) -> (i32, i32) {
    %c0_i32 = arith.constant 0 : i32
    %c0_i32_0 = arith.constant 0 : i32
    %c0_i32_1 = arith.constant 0 : i32
    return %c0_i32, %c0_i32_0 : i32, i32
  }
  func.func @transform_6(%arg0: i32) -> (i32, i32) {
    %c0_i32 = arith.constant 0 : i32
    %c0_i32_0 = arith.constant 0 : i32
    %c0_i32_1 = arith.constant 0 : i32
    return %c0_i32, %c0_i32_0 : i32, i32
  }
  func.func @transform_7(%arg0: i32) -> (i32, i32) {
    %c0_i32 = arith.constant 0 : i32
    %c0_i32_0 = arith.constant 0 : i32
    return %c0_i32, %arg0 : i32, i32
  }
}

</mosaic_0001>

<llo_original>
// kernel: tpu_custom_call.1
$region0: #{tpu_custom_call.1}
  #allocation0 [shape = 'u32[]', space=smem, size = 0x4, offset = 0x4, fixed_abs, tag = 'smem constant byte address 0x4 - core index']
  #allocation1 [shape = 'u32[144,128]{1,0:T(1,128)}', space=vmem, size = 0x12000, scoped, tag = 'internal scratch']
  %s0 = inlined_call_operand.vmem [shape: f32[8,8], index: 0, kind: input, shape index: {}]
  %s1 = inlined_call_operand.vmem [shape: bf16[8,128], index: 1, kind: input, shape index: {}]
  %s2 = inlined_call_operand.hbm [shape: f32[1,128], index: 2, kind: input, shape index: {}]
  %s3 = inlined_call_operand.hbm [shape: bf16[128,128], index: 3, kind: input, shape index: {}]
  %s4 = inlined_call_operand.vmem [shape: f32[1,128], index: 4, kind: input, shape index: {}]
  %s5 = inlined_call_operand.vmem [shape: bf16[8,128], index: 5, kind: input, shape index: {}]
  %s6 = inlined_call_operand.vmem [shape: f32[8,1], index: 6, kind: input, shape index: {}]
  %s7 = inlined_call_operand.hbm [shape: f32[8,8], index: 7, kind: output, shape index: {}]
  %s8 = sld [smem:[#allocation0]]
  $region46: #{tpu_custom_call.1} parent=0
    _
  %s10 = ssub.s32 1, %s8
  %s11 = scalar_select 0, %s10, %s8
  $region1: #{tpu_custom_call.1} parent=0
    #allocation2 [shape = 'u8[512]{0}', space=vmem, size = 0x400, scoped, tag = 'input window, operand 2, single buffered']
    #allocation3 [shape = 's32[1]{0}', space=sflag, size = 0x4, scoped, tag = 'scoped memory for tpu_custom_call.1']
    #allocation4 [shape = 's32[1]{0}', space=sflag, size = 0x4, scoped, tag = 'scoped memory for tpu_custom_call.1']
    #allocation5 [shape = 'u8[32768]{0}', space=vmem, size = 0x8000, scoped, tag = 'input window, operand 3, single buffered']
    #allocation6 [shape = 's32[1]{0}', space=sflag, size = 0x4, scoped, tag = 'scoped memory for tpu_custom_call.1']
    #allocation7 [shape = 'u8[4096]{0}', space=vmem, size = 0x1000, scoped, tag = 'output window, operand 0, single buffered']
    %12 = vsyncpa [#allocation3], 0
    %13 = vsyncpa [#allocation6], 0
    %14 = vsyncpa [#allocation4], 0
    // Predicated region
    $region2: #{tpu_custom_call.1} parent=1 // pred_check
      _
    $region3: #{tpu_custom_call.1} parent=1 // pred_check_branch
      %16 = sbr.rel (0) target = $region5
    $region4: #{tpu_custom_call.1} parent=1 // pred_region
      _
    $region5: #{tpu_custom_call.1} parent=1 // pred_fallthru
      _
    // Predicated region
    $region6: #{tpu_custom_call.1} parent=1 // pred_check
      _
    $region7: #{tpu_custom_call.1} parent=1 // pred_check_branch
      %18 = sbr.rel (0) target = $region9
    $region8: #{tpu_custom_call.1} parent=1 // pred_region
      _
    $region9: #{tpu_custom_call.1} parent=1 // pred_fallthru
      _
    // Predicated region
    $region10: #{tpu_custom_call.1} parent=1 // pred_check
      _
    $region11: #{tpu_custom_call.1} parent=1 // pred_check_branch
      %20 = sbr.rel (0) target = $region13
    $region12: #{tpu_custom_call.1} parent=1 // pred_region
      %s22 = ssub.s32 16, 16
      %23 = vsyncadd [#allocation3], %s22
      %s25 = sshll.u32 [#allocation2], 4
      %s26 = int_to_ptr.vmem [resolvable:$true] %s25
      %28 = dma.hbm_to_vmem [thread:$0]  %s2, 16, %s26, [#allocation3]
    $region13: #{tpu_custom_call.1} parent=1 // pred_fallthru
      _
    // Predicated region
    $region14: #{tpu_custom_call.1} parent=1 // pred_check
      _
    $region15: #{tpu_custom_call.1} parent=1 // pred_check_branch
      %30 = sbr.rel (0) target = $region17
    $region16: #{tpu_custom_call.1} parent=1 // pred_region
      %s32 = ssub.s32 1024, 1024
      %33 = vsyncadd [#allocation6], %s32
      %s34 = sshll.u32 [#allocation5], 4
      %s35 = int_to_ptr.vmem [resolvable:$true] %s34
      %40 = dma.hbm_to_vmem [thread:$0]  %s3, 1024, %s35, [#allocation6], 64, 64, 4
    $region17: #{tpu_custom_call.1} parent=1 // pred_fallthru
      _
    // Predicated region
    $region18: #{tpu_custom_call.1} parent=1 // pred_check
      _
    $region19: #{tpu_custom_call.1} parent=1 // pred_check_branch
      %42 = sbr.rel (0) target = $region21
    $region20: #{tpu_custom_call.1} parent=1 // pred_region
      _
    $region21: #{tpu_custom_call.1} parent=1 // pred_fallthru
      _
    // Predicated region
    $region22: #{tpu_custom_call.1} parent=1 // pred_check
      _
    $region23: #{tpu_custom_call.1} parent=1 // pred_check_branch
      %44 = sbr.rel (0) target = $region25
    $region24: #{tpu_custom_call.1} parent=1 // pred_region
      _
    $region25: #{tpu_custom_call.1} parent=1 // pred_fallthru
      _
    // Predicated region
    $region26: #{tpu_custom_call.1} parent=1 // pred_check
      _
    $region27: #{tpu_custom_call.1} parent=1 // pred_check_branch
      %46 = sbr.rel (0) target = $region29
    $region28: #{tpu_custom_call.1} parent=1 // pred_region
      _
    $region29: #{tpu_custom_call.1} parent=1 // pred_fallthru
      _
    // Predicated region
    $region30: #{tpu_custom_call.1} parent=1 // pred_check
      _
    $region31: #{tpu_custom_call.1} parent=1 // pred_check_branch
      %48 = sbr.rel (0) target = $region33
    $region32: #{tpu_custom_call.1} parent=1 // pred_region
      %49 = dma.done [#allocation3], 16
    $region33: #{tpu_custom_call.1} parent=1 // pred_fallthru
      _
    // Predicated region
    $region34: #{tpu_custom_call.1} parent=1 // pred_check
      _
    $region35: #{tpu_custom_call.1} parent=1 // pred_check_branch
      %51 = sbr.rel (0) target = $region37
    $region36: #{tpu_custom_call.1} parent=1 // pred_region
      %52 = dma.done [#allocation6], 1024
    $region37: #{tpu_custom_call.1} parent=1 // pred_fallthru
      _
    %v54 = vld [vmem:[%s0] sm:$0xff]
    %v55 = vpack.c.bf16 %v54, %v54
    %v56 = vld [vmem:[%s1] sm:$0xf]
    %v57 = vld [vmem:[#allocation2] sm:$0x1]
    %v59 = vlaneseq
    %v60 = vshrl.u32 %v59, 7
    %v61 = vsub.s32 0, %v60
    %v62 = vrot.slane %v57, %v61
    %vm64 = vcmask 64512
    %v66 = vsel %vm64, %v55, 0
    %vm68 = vcmask 1043456
    %v70 = vsel %vm68, %v56, 0
    %72 = vmatprep.subr.bf16.mxu0 0
    %73 = vmatpush1.bf16.msra.mxu0 %v70
    %74 = vmatprep.subr.bf16.mxu0 0
    %75 = vmatpush1.bf16.msra.mxu0 0
    %76 = vmatprep.subr.bf16.mxu0 0
    %77 = vmatpush1.bf16.msra.mxu0 0
    %78 = vmatprep.subr.bf16.mxu0 0
    %79 = vmatpush1.bf16.msra.mxu0 0
    %80 = vmatprep.subr.bf16.mxu0 0
    %81 = vmatpush1.bf16.msra.mxu0 0
    %82 = vmatprep.subr.bf16.mxu0 0
    %83 = vmatpush1.bf16.msra.mxu0 0
    %84 = vmatprep.subr.bf16.mxu0 0
    %85 = vmatpush1.bf16.msra.mxu0 0
    %86 = vmatprep.subr.bf16.mxu0 0
    %87 = vmatpush1.bf16.msra.mxu0 0
    %88 = vmatprep.subr.bf16.mxu0 0
    %89 = vmatpush1.bf16.msra.mxu0 0
    %90 = vmatprep.subr.bf16.mxu0 0
    %91 = vmatpush1.bf16.msra.mxu0 0
    %92 = vmatprep.subr.bf16.mxu0 0
    %93 = vmatpush1.bf16.msra.mxu0 0
    %94 = vmatprep.subr.bf16.mxu0 0
    %95 = vmatpush1.bf16.msra.mxu0 0
    %96 = vmatprep.subr.bf16.mxu0 0
    %97 = vmatpush1.bf16.msra.mxu0 0
    %98 = vmatprep.subr.bf16.mxu0 0
    %99 = vmatpush1.bf16.msra.mxu0 0
    %100 = vmatprep.subr.bf16.mxu0 0
    %101 = vmatpush1.bf16.msra.mxu0 0
    %102 = vmatprep.subr.bf16.mxu0 0
    %103 = vmatpush1.bf16.msra.mxu0 0
    %104 = vmatprep.mubr.bf16.mxu0 0
    %105 = vmatmul.mubr.bf16.gmra.mrb[0].mxu0 %v66
    %v106 = vpop.f32.mrb[0].mxu0
    %v107 = vadd.f32 %v62, %v106
    %v108 = vpop.f32.mrb[0].mxu0
    %v109 = vpop.f32.mrb[0].mxu0
    %v110 = vpop.f32.mrb[0].mxu0
    %111 = vdwg.mxu0
    %v112 = vmax.f32 %v107, 0.0
    %v113 = vpack.c.bf16 %v112, %v112
    %v114 = vld [vmem:[#allocation5] sm:$0xf]
    %v115 = vld [vmem:[#allocation5 + $0x4] sm:$0xf]
    %v116 = vld [vmem:[#allocation5 + $0x8] sm:$0xf]
    %v117 = vld [vmem:[#allocation5 + $0xc] sm:$0xf]
    %v118 = vld [vmem:[#allocation5 + $0x10] sm:$0xf]
    %v119 = vld [vmem:[#allocation5 + $0x14] sm:$0xf]
    %v120 = vld [vmem:[#allocation5 + $0x18] sm:$0xf]
    %v121 = vld [vmem:[#allocation5 + $0x1c] sm:$0xf]
    %v122 = vld [vmem:[#allocation5 + $0x20] sm:$0xf]
    %v123 = vld [vmem:[#allocation5 + $0x24] sm:$0xf]
    %v124 = vld [vmem:[#allocation5 + $0x28] sm:$0xf]
    %v125 = vld [vmem:[#allocation5 + $0x2c] sm:$0xf]
    %v126 = vld [vmem:[#allocation5 + $0x30] sm:$0xf]
    %v127 = vld [vmem:[#allocation5 + $0x34] sm:$0xf]
    %v128 = vld [vmem:[#allocation5 + $0x38] sm:$0xf]
    %v129 = vld [vmem:[#allocation5 + $0x3c] sm:$0xf]
    %v130 = vld [vmem:[%s4] sm:$0x1]
    %v132 = vlaneseq
    %v133 = vshrl.u32 %v132, 7
    %v134 = vsub.s32 0, %v133
    %v135 = vrot.slane %v130, %v134
    %v153 = vunpack.c.l.b16 %v114
    %v154 = vunpack.c.l.b16 %v115
    %v155 = vunpack.c.l.b16 %v116
    %v156 = vunpack.c.l.b16 %v117
    %v157 = vunpack.c.l.b16 %v118
    %v158 = vunpack.c.l.b16 %v119
    %v159 = vunpack.c.l.b16 %v120
    %v160 = vunpack.c.l.b16 %v121
    %v161 = vunpack.c.l.b16 %v122
    %v162 = vunpack.c.l.b16 %v123
    %v163 = vunpack.c.l.b16 %v124
    %v164 = vunpack.c.l.b16 %v125
    %v165 = vunpack.c.l.b16 %v126
    %v166 = vunpack.c.l.b16 %v127
    %v167 = vunpack.c.l.b16 %v128
    %v168 = vunpack.c.l.b16 %v129
    %v169 = vpack.c.b16 %v154, %v153
    %v170 = vpack.c.b16 %v156, %v155
    %v171 = vpack.c.b16 %v158, %v157
    %v172 = vpack.c.b16 %v160, %v159
    %v173 = vpack.c.b16 %v162, %v161
    %v174 = vpack.c.b16 %v164, %v163
    %v175 = vpack.c.b16 %v166, %v165
    %v176 = vpack.c.b16 %v168, %v167
    %185 = vmatprep.subr.bf16.mxu0 0
    %186 = vmatpush1.bf16.msra.mxu0 %v169
    %187 = vmatprep.subr.bf16.mxu0 0
    %188 = vmatpush1.bf16.msra.mxu0 %v170
    %189 = vmatprep.subr.bf16.mxu0 0
    %190 = vmatpush1.bf16.msra.mxu0 %v171
    %191 = vmatprep.subr.bf16.mxu0 0
    %192 = vmatpush1.bf16.msra.mxu0 %v172
    %193 = vmatprep.subr.bf16.mxu0 0
    %194 = vmatpush1.bf16.msra.mxu0 %v173
    %195 = vmatprep.subr.bf16.mxu0 0
    %196 = vmatpush1.bf16.msra.mxu0 %v174
    %197 = vmatprep.subr.bf16.mxu0 0
    %198 = vmatpush1.bf16.msra.mxu0 %v175
    %199 = vmatprep.subr.bf16.mxu0 0
    %200 = vmatpush1.bf16.msra.mxu0 %v176
    %201 = vmatprep.subr.bf16.mxu0 0
    %202 = vmatpush1.bf16.msra.mxu0 0
    %203 = vmatprep.subr.bf16.mxu0 0
    %204 = vmatpush1.bf16.msra.mxu0 0
    %205 = vmatprep.subr.bf16.mxu0 0
    %206 = vmatpush1.bf16.msra.mxu0 0
    %207 = vmatprep.subr.bf16.mxu0 0
    %208 = vmatpush1.bf16.msra.mxu0 0
    %209 = vmatprep.subr.bf16.mxu0 0
    %210 = vmatpush1.bf16.msra.mxu0 0
    %211 = vmatprep.subr.bf16.mxu0 0
    %212 = vmatpush1.bf16.msra.mxu0 0
    %213 = vmatprep.subr.bf16.mxu0 0
    %214 = vmatpush1.bf16.msra.mxu0 0
    %215 = vmatprep.subr.bf16.mxu0 0
    %216 = vmatpush1.bf16.msra.mxu0 0
    %217 = vmatprep.mubr.bf16.mxu0 0
    %218 = vmatmul.mubr.bf16.gmra.mrb[0].mxu0 %v113
    %v219 = vpop.f32.mrb[0].mxu0
    %v220 = vadd.f32 %v135, %v219
    %v221 = vpop.f32.mrb[0].mxu0
    %v222 = vpop.f32.mrb[0].mxu0
    %v223 = vpop.f32.mrb[0].mxu0
    %224 = vdwg.mxu0
    %v225 = vmax.f32 %v220, 0.0
    %v226 = vld [vmem:[%s5] sm:$0xf]
    %v227 = vpack.c.bf16 %v225, %v225
    %v228 = vld [vmem:[%s6] sm:$0xff]
    %230 = vset.pattern.permute.xlu0 0
    %231 = vperm.xlu0 %230, %v228
    %v232 = vpop.permute.xlu0 %231
    %234 = vmatprep.subr.bf16.mxu0 0
    %235 = vmatpush1.bf16.xpose.msra.mxu0 %v227
    %236 = vmatprep.subr.bf16.mxu0 0
    %237 = vmatpush1.bf16.xpose.msra.mxu0 0
    %238 = vmatprep.subr.bf16.mxu0 0
    %239 = vmatpush1.bf16.xpose.msra.mxu0 0
    %240 = vmatprep.subr.bf16.mxu0 0
    %241 = vmatpush1.bf16.xpose.msra.mxu0 0
    %242 = vmatprep.subr.bf16.mxu0 0
    %243 = vmatpush1.bf16.xpose.msra.mxu0 0
    %244 = vmatprep.subr.bf16.mxu0 0
    %245 = vmatpush1.bf16.xpose.msra.mxu0 0
    %246 = vmatprep.subr.bf16.mxu0 0
    %247 = vmatpush1.bf16.xpose.msra.mxu0 0
    %248 = vmatprep.subr.bf16.mxu0 0
    %249 = vmatpush1.bf16.xpose.msra.mxu0 0
    %250 = vmatprep.subr.bf16.mxu0 0
    %251 = vmatpush1.bf16.xpose.msra.mxu0 0
    %252 = vmatprep.subr.bf16.mxu0 0
    %253 = vmatpush1.bf16.xpose.msra.mxu0 0
    %254 = vmatprep.subr.bf16.mxu0 0
    %255 = vmatpush1.bf16.xpose.msra.mxu0 0
    %256 = vmatprep.subr.bf16.mxu0 0
    %257 = vmatpush1.bf16.xpose.msra.mxu0 0
    %258 = vmatprep.subr.bf16.mxu0 0
    %259 = vmatpush1.bf16.xpose.msra.mxu0 0
    %260 = vmatprep.subr.bf16.mxu0 0
    %261 = vmatpush1.bf16.xpose.msra.mxu0 0
    %262 = vmatprep.subr.bf16.mxu0 0
    %263 = vmatpush1.bf16.xpose.msra.mxu0 0
    %264 = vmatprep.subr.bf16.mxu0 0
    %265 = vmatpush1.bf16.xpose.msra.mxu0 0
    %266 = vmatprep.mubr.bf16.mxu0 0
    %267 = vmatmul.mubr.bf16.gmra.mrb[0].mxu0 %v226
    %v268 = vpop.f32.mrb[0].mxu0
    %v269 = vadd.f32 %v232, %v268
    %v270 = vpop.f32.mrb[0].mxu0
    %v271 = vpop.f32.mrb[0].mxu0
    %v272 = vpop.f32.mrb[0].mxu0
    %273 = vdwg.mxu0
    %v274 = vtanh.pop %v269
    %v275 = vmul.f32 %v274, 2.0
    %vm276 = vcmp.gt.f32.partialorder %v269, 20.0
    %v277 = vmin.f32 %v269, 20.0
    %v278 = vmul.f32 %v277, 1.442695
    %v279 = vpow.pop %v278
    %v280 = vadd.f32 %v279, 1.0
    %v281 = vlog2.pop %v280
    %v282 = vmul.f32 %v281, 0.6931472
    %v283 = vmul.f32 -0.5, %v279
    %v284 = vadd.f32 %v283, 1.0
    %v285 = vmul.f32 %v284, %v279
    %v286 = vand.u32 2147483647, %v279
    %vm287 = vcmp.lt.f32.partialorder %v286, 0.0004427343
    %v288 = vsel %vm287, %v285, %v282
    %v289 = vsel %vm276, %v269, %v288
    %v290 = vlaneseq
    %v291 = vshrl.u32 %v290, 7
    %vm292 = vcmp.lt.s32.totalorder %v291, 4
    %v293 = vsel %vm292, %v275, %v289
    %294 = vst.msk [vmem:[#allocation7] sm:$0xff] %vm64, %v293
    // Predicated region
    $region38: #{tpu_custom_call.1} parent=1 // pred_check
      _
    $region39: #{tpu_custom_call.1} parent=1 // pred_check_branch
      %296 = sbr.rel (0) target = $region41
    $region40: #{tpu_custom_call.1} parent=1 // pred_region
      %s298 = ssub.s32 128, 128
      %299 = vsyncadd [#allocation4], %s298
      %s301 = sshll.u32 [#allocation7], 4
      %s302 = int_to_ptr.vmem [resolvable:$true] %s301
      %304 = dma.vmem_to_hbm [thread:$0]  %s302, 128, %s7, [#allocation4]
    $region41: #{tpu_custom_call.1} parent=1 // pred_fallthru
      _
    // Predicated region
    $region42: #{tpu_custom_call.1} parent=1 // pred_check
      _
    $region43: #{tpu_custom_call.1} parent=1 // pred_check_branch
      %306 = sbr.rel (0) target = $region45
    $region44: #{tpu_custom_call.1} parent=1 // pred_region
      %307 = dma.done [#allocation4], 128
    $region45: #{tpu_custom_call.1} parent=1 // pred_fallthru
      _
    %308 = vsyncpa [#allocation3], 1
    %309 = vsyncpa [#allocation6], 1
    %310 = vsyncpa [#allocation4], 1

</llo_original>
